<compile_context>
chip_gen: v5e
topology: v5e:2x2
jax: 0.10.0
libtpu: 0.0.40
codegen_flags: <defaults>
</compile_context>

<pallas_src>
import jax
import jax.numpy as jnp
from jax.experimental import pallas as pl
from jax.experimental.pallas import tpu as pltpu


def _identity_kernel(x_ref, o_ref):
    # Pass-through of the current lane-dense tile of x.
    o_ref[...] = x_ref[...]


def testnet_forward(gamma, x, y, mask):
    """Semantically identical to TestNet.forward: returns x (gamma, y, mask unused)."""
    del gamma, y, mask  # unused, matching the reference module; never DMA'd

    orig_shape = x.shape
    total = x.size
    itemsize = jnp.dtype(x.dtype).itemsize

    # Pick the widest lane-dense column count (multiple of 128) dividing the
    # total element count, up to 1024 lanes.
    cols = 0
    for c in (1024, 512, 256, 128):
        if total % c == 0:
            cols = c
            break

    if cols == 0:
        # Rare fallback: element count not a multiple of 128. A full-array
        # block is always legal (block dims == array dims), still aliased.
        return pl.pallas_call(
            _identity_kernel,
            out_shape=jax.ShapeDtypeStruct(orig_shape, x.dtype),
            in_specs=[pl.BlockSpec(orig_shape, lambda: (0,) * len(orig_shape))],
            out_specs=pl.BlockSpec(orig_shape, lambda: (0,) * len(orig_shape)),
            input_output_aliases={0: 0},
        )(x)

    rows = total // cols
    x2 = x.reshape(rows, cols)

    # Row-tile sizing: cap each buffer at ~4 MiB so 2x double-buffered
    # (input + output) copies comfortably fit every generation's VMEM
    # (v5e 16 MiB scoped default, v7x 64 MiB physical), and keep the tile a
    # multiple of 8 sublanes.
    max_rows = max(8, (4 * 1024 * 1024) // (cols * itemsize))
    if rows >= 8:
        tm = min(rows, max_rows)
        tm = max(8, (tm // 8) * 8)
    else:
        tm = rows  # block equals full array dims -> legal for any size

    grid = (pl.cdiv(rows, tm),)

    out2 = pl.pallas_call(
        _identity_kernel,
        out_shape=jax.ShapeDtypeStruct((rows, cols), x.dtype),
        grid=grid,
        in_specs=[pl.BlockSpec((tm, cols), lambda i: (i, 0))],
        out_specs=pl.BlockSpec((tm, cols), lambda i: (i, 0)),
        input_output_aliases={0: 0},
        compiler_params=pltpu.CompilerParams(
            dimension_semantics=("parallel",)
        ),
    )(x2)

    return out2.reshape(orig_shape)


if __name__ == "__main__":
    key = jax.random.PRNGKey(0)
    k_gamma, k_x, k_y, k_mask = jax.random.split(key, 4)

    B, S, H = 2, 8, 32
    gamma = jax.random.uniform(k_gamma, (B,), dtype=jnp.float32)
    x = jax.random.normal(k_x, (B, S, H), dtype=jnp.float32)
    y = jax.random.normal(k_y, (B, S, H), dtype=jnp.float32)
    mask = (jax.random.uniform(k_mask, (B, S)) > 0.5).astype(jnp.float32)

    out = testnet_forward(gamma, x, y, mask)
    out = jax.block_until_ready(out)

    assert out.shape == x.shape and out.dtype == x.dtype
    assert bool(jnp.all(out == x))
    print("KERNEL_OK")
</pallas_src>

<mosaic_0001>
module attributes {stable_mosaic.version = 11 : i64} {
  func.func @_identity_kernel(%arg0: i32, %arg1: memref<1x512xf32, #tpu.memory_space<vmem>>, %arg2: memref<1x512xf32, #tpu.memory_space<vmem>>) attributes {dimension_semantics = [#tpu.dimension_semantics<parallel>], iteration_bounds = array<i64: 1>, scalar_prefetch = 0 : i64, scratch_operands = 0 : i64, tpu.core_type = #tpu.core_type<tc>, window_params = [{transform_indices = @transform_0, window_bounds = array<i64: 1, 512>}, {transform_indices = @transform_1, window_bounds = array<i64: 1, 512>}]} {
    %c0 = arith.constant 0 : index
    %c0_0 = arith.constant 0 : index
    %0 = vector.load %arg1[%c0, %c0_0] : memref<1x512xf32, #tpu.memory_space<vmem>>, vector<1x512xf32>
    %c0_1 = arith.constant 0 : index
    %c0_2 = arith.constant 0 : index
    %1 = vector.load %arg2[%c0_1, %c0_2] : memref<1x512xf32, #tpu.memory_space<vmem>>, vector<1x512xf32>
    tpu.vector_store %arg2[%c0_1, %c0_2], %0 {strides = array<i32>} : memref<1x512xf32, #tpu.memory_space<vmem>>, vector<1x512xf32>,
    return
  }
  func.func @transform_0(%arg0: i32) -> (i32, i32) {
    %c0_i32 = arith.constant 0 : i32
    %c0_i32_0 = arith.constant 0 : i32
    return %arg0, %c0_i32 : i32, i32
  }
  func.func @transform_1(%arg0: i32) -> (i32, i32) {
    %c0_i32 = arith.constant 0 : i32
    %c0_i32_0 = arith.constant 0 : i32
    return %arg0, %c0_i32 : i32, i32
  }
}

</mosaic_0001>

<llo_original>
// kernel: tpu_custom_call.1
$region0: #{tpu_custom_call.1}
  #allocation0 [shape = 'u32[]', space=smem, size = 0x4, offset = 0x4, fixed_abs, tag = 'smem constant byte address 0x4 - core index']
  #allocation1 [shape = 'u32[72,128]{1,0:T(1,128)}', space=vmem, size = 0x9000, scoped, tag = 'internal scratch']
  %s0 = inlined_call_operand.hbm [shape: f32[1,512], index: 0, kind: input, shape index: {}, may-alias: {0,1}]
  %s1 = inlined_call_operand.hbm [shape: f32[1,512], index: 1, kind: output, shape index: {}, may-alias: {0,1}]
  %s2 = sld [smem:[#allocation0]]
  $region18: #{tpu_custom_call.1} parent=0
    _
  %s4 = ssub.s32 1, %s2
  %s5 = scalar_select 0, %s4, %s2
  $region1: #{tpu_custom_call.1} parent=0
    #allocation2 [shape = 'u8[2048]{0}', space=vmem, size = 0x800, scoped, tag = 'input window, operand 0, single buffered']
    #allocation3 [shape = 's32[1]{0}', space=sflag, size = 0x4, scoped, tag = 'scoped memory for tpu_custom_call.1']
    #allocation4 [shape = 's32[1]{0}', space=sflag, size = 0x4, scoped, tag = 'scoped memory for tpu_custom_call.1']
    #allocation5 [shape = 'u8[2048]{0}', space=vmem, size = 0x800, scoped, tag = 'output window, operand 0, single buffered']
    %6 = vsyncpa [#allocation3], 0
    %7 = vsyncpa [#allocation4], 0
    // Predicated region
    $region2: #{tpu_custom_call.1} parent=1 // pred_check
      _
    $region3: #{tpu_custom_call.1} parent=1 // pred_check_branch
      %9 = sbr.rel (0) target = $region5
    $region4: #{tpu_custom_call.1} parent=1 // pred_region
      %11 = vsyncadd [#allocation3], 0
      %s13 = sshll.u32 %s0, 4
      %s14 = int_to_ptr.hbm [resolvable:$true] %s13
      %s15 = sshll.u32 [#allocation2], 4
      %s16 = int_to_ptr.vmem [resolvable:$true] %s15
      %18 = dma.hbm_to_vmem [thread:$0]  %s14, 64, %s16, [#allocation3]
    $region5: #{tpu_custom_call.1} parent=1 // pred_fallthru
      _
    // Predicated region
    $region6: #{tpu_custom_call.1} parent=1 // pred_check
      _
    $region7: #{tpu_custom_call.1} parent=1 // pred_check_branch
      %20 = sbr.rel (0) target = $region9
    $region8: #{tpu_custom_call.1} parent=1 // pred_region
      %22 = dma.done [#allocation3], 64
    $region9: #{tpu_custom_call.1} parent=1 // pred_fallthru
      _
    %v23 = vld [vmem:[#allocation2] sm:$0xf]
    %v24 = vlaneseq
    %vm25 = vcmp.ge.s32.totalorder %v24, 0
    %vm26 = vcmp.lt.s32.totalorder %v24, 512
    %vm27 = vmand %vm25, %vm26
    %28 = vst.msk [vmem:[#allocation5] sm:$0xf] %vm27, %v23
    // Predicated region
    $region10: #{tpu_custom_call.1} parent=1 // pred_check
      _
    $region11: #{tpu_custom_call.1} parent=1 // pred_check_branch
      %30 = sbr.rel (0) target = $region13
    $region12: #{tpu_custom_call.1} parent=1 // pred_region
      %32 = vsyncadd [#allocation4], 0
      %s34 = sshll.u32 [#allocation5], 4
      %s35 = int_to_ptr.vmem [resolvable:$true] %s34
      %s36 = sshll.u32 %s1, 4
      %s37 = int_to_ptr.hbm [resolvable:$true] %s36
      %39 = dma.vmem_to_hbm [thread:$0]  %s35, 64, %s37, [#allocation4]
    $region13: #{tpu_custom_call.1} parent=1 // pred_fallthru
      _
    // Predicated region
    $region14: #{tpu_custom_call.1} parent=1 // pred_check
      _
    $region15: #{tpu_custom_call.1} parent=1 // pred_check_branch
      %41 = sbr.rel (0) target = $region17
    $region16: #{tpu_custom_call.1} parent=1 // pred_region
      %43 = dma.done [#allocation4], 64
    $region17: #{tpu_custom_call.1} parent=1 // pred_fallthru
      _
    %44 = vsyncpa [#allocation3], 1
    %45 = vsyncpa [#allocation4], 1

</llo_original>
